<compile_context>
chip_gen: v6e
topology: v6e:2x2x1
jax: 0.10.0
libtpu: 0.0.40
codegen_flags: <defaults>
</compile_context>

<pallas_src>
import functools
import math

import jax
import jax.numpy as jnp
import numpy as np
from jax.experimental import pallas as pl
from jax.experimental.pallas import tpu as pltpu

LEAKY_SLOPE = 0.01       # nn.functional.leaky_relu default
LN_EPS = 1e-5            # nn.LayerNorm default
TINY = 3.4028e-38        # constant from FNN_v1.normalize


# ----------------------------------------------------------------------------
# Kernel 1: per-edge MLP, edge-on-lane layout.
#   activations y: [feature, block_e]   (features on sublanes, edges on lanes)
#   Linear -> leaky_relu -> dropout(identity) -> LayerNorm, x (num_layers-1),
#   then Linear -> relu.
# ----------------------------------------------------------------------------
def _mlp_kernel(num_layers, out_dim, y_ref, *refs):
    # refs = [w0,b0,g0,beta0, w1,b1,g1,beta1, ..., w_last,b_last, out_ref]
    out_ref = refs[-1]
    params = [r[...] for r in refs[:-1]]          # all tiny; load once per step
    y = y_ref[...].astype(jnp.float32)            # [in_dim, block_e]

    p = 0
    for _ in range(num_layers - 1):
        w = params[p]        # [H, d_in]   (PyTorch nn.Linear weight layout)
        b = params[p + 1]    # [H, 1]
        g = params[p + 2]    # [H, 1]
        be = params[p + 3]   # [H, 1]
        p += 4
        d_in = w.shape[1]
        if d_in <= 8:
            # Tiny-K first layer: keep it off the MXU (VPU broadcast-mul-add).
            acc = b + w[:, 0:1] * y[0:1, :]
            for k in range(1, d_in):
                acc = acc + w[:, k:k + 1] * y[k:k + 1, :]
            y = acc                                     # [H, block_e]
        else:
            # Hidden HxH layers: MXU matmul, N = block_e is lane-dense.
            y = jnp.dot(w, y, preferred_element_type=jnp.float32) + b
        # leaky_relu
        y = jnp.where(y > 0, y, LEAKY_SLOPE * y)
        # TODO(synk): F.dropout implemented as identity (inference / eval mode).
        # LayerNorm over the feature axis (axis 0), fused mean / mean-of-squares.
        inv_h = 1.0 / y.shape[0]
        mu = jnp.sum(y, axis=0, keepdims=True) * inv_h
        ms = jnp.sum(y * y, axis=0, keepdims=True) * inv_h
        var = jnp.maximum(ms - mu * mu, 0.0)
        y = (y - mu) * jax.lax.rsqrt(var + LN_EPS) * g + be

    w = params[p]            # out_dim==1: [H, 1] (pre-transposed); else [out_dim, H]
    b = params[p + 1]        # out_dim==1: [1, 1];                  else [out_dim, 1]
    if out_dim == 1:
        # N=1 last Linear as VPU multiply + sublane (XLU) reduce -> [1, block_e]
        out = jnp.sum(w * y, axis=0, keepdims=True) + b
    else:
        out = jnp.dot(w, y, preferred_element_type=jnp.float32) + b
    out_ref[...] = jnp.maximum(out, 0.0).astype(out_ref.dtype)      # relu


def mlp_forward(y0_t, kparams, num_layers, out_dim, max_block_e=4096):
    """y0_t: [in_dim, E] edge features (edges on the lane axis)."""
    in_dim, E = y0_t.shape
    # Adaptive tile: big enough to amortize per-step overhead (~600 cyc), but
    # don't over-pad tiny problems.  Capped at 4096 so it is also v7x-safe.
    block_e = min(max_block_e, ((E + 127) // 128) * 128)
    e_pad = ((E + block_e - 1) // block_e) * block_e
    y0p = jnp.pad(y0_t, ((0, 0), (0, e_pad - E)))

    in_specs = [pl.BlockSpec((in_dim, block_e), lambda i: (0, i))]
    for prm in kparams:
        in_specs.append(pl.BlockSpec(prm.shape, lambda i: (0, 0)))   # full array

    out = pl.pallas_call(
        functools.partial(_mlp_kernel, num_layers, out_dim),
        grid=(e_pad // block_e,),
        in_specs=in_specs,
        out_specs=pl.BlockSpec((out_dim, block_e), lambda i: (0, i)),
        out_shape=jax.ShapeDtypeStruct((out_dim, e_pad), jnp.float32),
        compiler_params=pltpu.CompilerParams(
            dimension_semantics=("parallel",),          # shards grid on v7x 2xTC
            vmem_limit_bytes=32 * 1024 * 1024,          # safe on v5e/v6e/v7x
        ),
    )(y0p, *kparams)
    return out[:, :E]


# ----------------------------------------------------------------------------
# Kernel 2: normalize() elementwise part:
#   min(y * d_i / (s_i + tiny), y * d_j / (s_j + tiny))
# Tiled (block_rows x 128) with a parallel grid; divides moved to the EUP.
# ----------------------------------------------------------------------------
def _normalize_kernel(y_ref, di_ref, si_ref, dj_ref, sj_ref, o_ref):
    y = y_ref[...]
    ri = pl.reciprocal(si_ref[...] + TINY, approx=True)
    rj = pl.reciprocal(sj_ref[...] + TINY, approx=True)
    o_ref[...] = jnp.minimum(y * di_ref[...] * ri, y * dj_ref[...] * rj)


def normalize_elementwise(y, d_i, s_i, d_j, s_j, max_block_rows=512, lane=128):
    E = y.shape[0]
    rows = (E + lane - 1) // lane
    block_rows = min(max_block_rows, ((rows + 7) // 8) * 8)
    rows_pad = ((rows + block_rows - 1) // block_rows) * block_rows
    e_pad = rows_pad * lane

    def prep(a):
        return jnp.pad(a.astype(jnp.float32), (0, e_pad - E)).reshape(rows_pad, lane)

    args = [prep(a) for a in (y, d_i, s_i, d_j, s_j)]
    spec = pl.BlockSpec((block_rows, lane), lambda i: (i, 0))
    out = pl.pallas_call(
        _normalize_kernel,
        grid=(rows_pad // block_rows,),
        in_specs=[spec] * 5,
        out_specs=spec,
        out_shape=jax.ShapeDtypeStruct((rows_pad, lane), jnp.float32),
        compiler_params=pltpu.CompilerParams(dimension_semantics=("parallel",)),
    )(*args)
    return out.reshape(e_pad)[:E]


# ----------------------------------------------------------------------------
# Parameter init (PyTorch nn.Linear / nn.LayerNorm layout & uniform bounds)
# ----------------------------------------------------------------------------
def init_params(key, input_dim, hidden_dim, output_dim, num_layers):
    dims = [input_dim] + [hidden_dim] * (num_layers - 1) + [output_dim]
    linears, norms = [], []
    for i in range(num_layers):
        key, kw, kb = jax.random.split(key, 3)
        bound = 1.0 / math.sqrt(dims[i])
        w = jax.random.uniform(kw, (dims[i + 1], dims[i]), jnp.float32, -bound, bound)
        b = jax.random.uniform(kb, (dims[i + 1],), jnp.float32, -bound, bound)
        linears.append((w, b))
        if i < num_layers - 1:                  # LayerNorm after all but last Linear
            norms.append((jnp.ones((hidden_dim,), jnp.float32),
                          jnp.zeros((hidden_dim,), jnp.float32)))
    return linears, norms


def prep_kernel_params(linears, norms, output_dim):
    """Arrange params for the edge-on-lane kernel (pre-transposed in wrapper)."""
    kparams = []
    for i in range(len(linears) - 1):
        w, b = linears[i]
        g, be = norms[i]
        kparams += [w, b.reshape(-1, 1), g.reshape(-1, 1), be.reshape(-1, 1)]
    w, b = linears[-1]
    if output_dim == 1:
        kparams += [w.T, b.reshape(1, 1)]       # [H,1], [1,1]  -> VPU reduce path
    else:
        kparams += [w, b.reshape(-1, 1)]
    return kparams


# ----------------------------------------------------------------------------
# Full FNN_v1.forward
# ----------------------------------------------------------------------------
def fnn_v1_forward(x_s, x_t, edge_index, edge_weight, linears, norms, num_layers):
    src = edge_index[0]
    dst = edge_index[1]
    d_i = x_s[:, 1][src]
    d_j = x_t[:, 1][dst]

    # per-edge input features, already transposed to [in_dim, E] (gather glue)
    y0_t = jnp.concatenate([d_i[None, :], d_j[None, :], edge_weight.T], axis=0)

    out_dim = linears[-1][0].shape[0]
    kparams = prep_kernel_params(linears, norms, out_dim)
    y = mlp_forward(y0_t, kparams, num_layers, out_dim)        # [out_dim, E]
    y = y[0] if out_dim == 1 else jnp.squeeze(y)               # torch .squeeze()

    # index_add_ scatter-sums (plain-JAX glue; no clean Pallas scatter)
    y_sum_i = jnp.zeros(x_s.shape[0], y.dtype).at[src].add(y)
    y_sum_j = jnp.zeros(x_t.shape[0], y.dtype).at[dst].add(y)

    return normalize_elementwise(y, d_i, y_sum_i[src], d_j, y_sum_j[dst])


# ----------------------------------------------------------------------------
# Pure-JAX reference (for self-check)
# ----------------------------------------------------------------------------
def fnn_v1_reference(x_s, x_t, edge_index, edge_weight, linears, norms):
    src, dst = edge_index[0], edge_index[1]
    y = jnp.concatenate(
        [x_s[:, 1][src][:, None], x_t[:, 1][dst][:, None], edge_weight], axis=1)
    for i in range(len(linears) - 1):
        w, b = linears[i]
        g, be = norms[i]
        y = y @ w.T + b
        y = jnp.where(y > 0, y, LEAKY_SLOPE * y)
        mu = y.mean(-1, keepdims=True)
        var = ((y - mu) ** 2).mean(-1, keepdims=True)
        y = (y - mu) / jnp.sqrt(var + LN_EPS) * g + be
    w, b = linears[-1]
    y = jnp.maximum(y @ w.T + b, 0.0).squeeze()
    y_sum_i = jnp.zeros(x_s.shape[0], y.dtype).at[src].add(y)
    y_sum_j = jnp.zeros(x_t.shape[0], y.dtype).at[dst].add(y)
    yi = y * x_s[:, 1][src] / (y_sum_i[src] + TINY)
    yj = y * x_t[:, 1][dst] / (y_sum_j[dst] + TINY)
    return jnp.minimum(yi, yj)


if __name__ == "__main__":
    key = jax.random.PRNGKey(0)
    # small, forward-consistent shapes
    N_S, N_T, F, E = 10, 12, 4, 200
    INPUT_DIM, HIDDEN_DIM, OUTPUT_DIM, NUM_LAYERS = 3, 32, 1, 3  # input_dim = 2 + edge_weight width

    k1, k2, k3, k4, k5, kp = jax.random.split(key, 6)
    x_s = jax.random.uniform(k1, (N_S, F), jnp.float32, 0.1, 2.0)
    x_t = jax.random.uniform(k2, (N_T, F), jnp.float32, 0.1, 2.0)
    edge_index = jnp.stack([
        jax.random.randint(k3, (E,), 0, N_S, dtype=jnp.int32),
        jax.random.randint(k4, (E,), 0, N_T, dtype=jnp.int32),
    ])
    edge_weight = jax.random.uniform(k5, (E, 1), jnp.float32)

    linears, norms = init_params(kp, INPUT_DIM, HIDDEN_DIM, OUTPUT_DIM, NUM_LAYERS)

    out = fnn_v1_forward(x_s, x_t, edge_index, edge_weight, linears, norms, NUM_LAYERS)
    out = jax.block_until_ready(out)

    ref = fnn_v1_reference(x_s, x_t, edge_index, edge_weight, linears, norms)
    assert out.shape == (E,)
    np.testing.assert_allclose(np.asarray(out), np.asarray(ref), rtol=2e-3, atol=2e-3)

    print("KERNEL_OK")
</pallas_src>

<mosaic_0001>
module attributes {stable_mosaic.version = 11 : i64} {
  func.func @_mlp_kernel(%arg0: i32, %arg1: memref<3x256xf32, #tpu.memory_space<vmem>>, %arg2: memref<32x3xf32, #tpu.memory_space<vmem>>, %arg3: memref<32x1xf32, #tpu.memory_space<vmem>>, %arg4: memref<32x1xf32, #tpu.memory_space<vmem>>, %arg5: memref<32x1xf32, #tpu.memory_space<vmem>>, %arg6: memref<32x32xf32, #tpu.memory_space<vmem>>, %arg7: memref<32x1xf32, #tpu.memory_space<vmem>>, %arg8: memref<32x1xf32, #tpu.memory_space<vmem>>, %arg9: memref<32x1xf32, #tpu.memory_space<vmem>>, %arg10: memref<32x1xf32, #tpu.memory_space<vmem>>, %arg11: memref<1x1xf32, #tpu.memory_space<vmem>>, %arg12: memref<1x256xf32, #tpu.memory_space<vmem>>) attributes {dimension_semantics = [#tpu.dimension_semantics<parallel>], iteration_bounds = array<i64: 1>, scalar_prefetch = 0 : i64, scratch_operands = 0 : i64, tpu.core_type = #tpu.core_type<tc>, window_params = [{transform_indices = @transform_0, window_bounds = array<i64: 3, 256>}, {pipeline_mode = #tpu.pipeline_mode<synchronous>, transform_indices = @transform_1, window_bounds = array<i64: 32, 3>}, {pipeline_mode = #tpu.pipeline_mode<synchronous>, transform_indices = @transform_2, window_bounds = array<i64: 32, 1>}, {pipeline_mode = #tpu.pipeline_mode<synchronous>, transform_indices = @transform_3, window_bounds = array<i64: 32, 1>}, {pipeline_mode = #tpu.pipeline_mode<synchronous>, transform_indices = @transform_4, window_bounds = array<i64: 32, 1>}, {pipeline_mode = #tpu.pipeline_mode<synchronous>, transform_indices = @transform_5, window_bounds = array<i64: 32, 32>}, {pipeline_mode = #tpu.pipeline_mode<synchronous>, transform_indices = @transform_6, window_bounds = array<i64: 32, 1>}, {pipeline_mode = #tpu.pipeline_mode<synchronous>, transform_indices = @transform_7, window_bounds = array<i64: 32, 1>}, {pipeline_mode = #tpu.pipeline_mode<synchronous>, transform_indices = @transform_8, window_bounds = array<i64: 32, 1>}, {pipeline_mode = #tpu.pipeline_mode<synchronous>, transform_indices = @transform_9, window_bounds = array<i64: 32, 1>}, {pipeline_mode = #tpu.pipeline_mode<synchronous>, transform_indices = @transform_10, window_bounds = array<i64: 1, 1>}, {transform_indices = @transform_11, window_bounds = array<i64: 1, 256>}]} {
    %c0 = arith.constant 0 : index
    %c0_0 = arith.constant 0 : index
    %0 = vector.load %arg2[%c0, %c0_0] : memref<32x3xf32, #tpu.memory_space<vmem>>, vector<32x3xf32>
    %c0_1 = arith.constant 0 : index
    %c0_2 = arith.constant 0 : index
    %1 = vector.load %arg3[%c0_1, %c0_2] : memref<32x1xf32, #tpu.memory_space<vmem>>, vector<32x1xf32>
    %c0_3 = arith.constant 0 : index
    %c0_4 = arith.constant 0 : index
    %2 = vector.load %arg4[%c0_3, %c0_4] : memref<32x1xf32, #tpu.memory_space<vmem>>, vector<32x1xf32>
    %c0_5 = arith.constant 0 : index
    %c0_6 = arith.constant 0 : index
    %3 = vector.load %arg5[%c0_5, %c0_6] : memref<32x1xf32, #tpu.memory_space<vmem>>, vector<32x1xf32>
    %c0_7 = arith.constant 0 : index
    %c0_8 = arith.constant 0 : index
    %4 = vector.load %arg6[%c0_7, %c0_8] : memref<32x32xf32, #tpu.memory_space<vmem>>, vector<32x32xf32>
    %c0_9 = arith.constant 0 : index
    %c0_10 = arith.constant 0 : index
    %5 = vector.load %arg7[%c0_9, %c0_10] : memref<32x1xf32, #tpu.memory_space<vmem>>, vector<32x1xf32>
    %c0_11 = arith.constant 0 : index
    %c0_12 = arith.constant 0 : index
    %6 = vector.load %arg8[%c0_11, %c0_12] : memref<32x1xf32, #tpu.memory_space<vmem>>, vector<32x1xf32>
    %c0_13 = arith.constant 0 : index
    %c0_14 = arith.constant 0 : index
    %7 = vector.load %arg9[%c0_13, %c0_14] : memref<32x1xf32, #tpu.memory_space<vmem>>, vector<32x1xf32>
    %c0_15 = arith.constant 0 : index
    %c0_16 = arith.constant 0 : index
    %8 = vector.load %arg10[%c0_15, %c0_16] : memref<32x1xf32, #tpu.memory_space<vmem>>, vector<32x1xf32>
    %c0_17 = arith.constant 0 : index
    %c0_18 = arith.constant 0 : index
    %9 = vector.load %arg11[%c0_17, %c0_18] : memref<1x1xf32, #tpu.memory_space<vmem>>, vector<1x1xf32>
    %c0_19 = arith.constant 0 : index
    %c0_20 = arith.constant 0 : index
    %10 = vector.load %arg1[%c0_19, %c0_20] : memref<3x256xf32, #tpu.memory_space<vmem>>, vector<3x256xf32>
    %11 = vector.extract_strided_slice %0 {offsets = [0, 0], sizes = [32, 1], strides = [1, 1]} : vector<32x3xf32> to vector<32x1xf32>
    %12 = vector.extract_strided_slice %10 {offsets = [0, 0], sizes = [1, 256], strides = [1, 1]} : vector<3x256xf32> to vector<1x256xf32>
    %13 = vector.broadcast %11 : vector<32x1xf32> to vector<32x256xf32>
    %14 = vector.broadcast %12 : vector<1x256xf32> to vector<32x256xf32>
    %15 = arith.mulf %13, %14 : vector<32x256xf32>
    %16 = vector.broadcast %1 : vector<32x1xf32> to vector<32x256xf32>
    %17 = arith.addf %16, %15 : vector<32x256xf32>
    %18 = vector.extract_strided_slice %0 {offsets = [0, 1], sizes = [32, 1], strides = [1, 1]} : vector<32x3xf32> to vector<32x1xf32>
    %19 = vector.extract_strided_slice %10 {offsets = [1, 0], sizes = [1, 256], strides = [1, 1]} : vector<3x256xf32> to vector<1x256xf32>
    %20 = vector.broadcast %18 : vector<32x1xf32> to vector<32x256xf32>
    %21 = vector.broadcast %19 : vector<1x256xf32> to vector<32x256xf32>
    %22 = arith.mulf %20, %21 : vector<32x256xf32>
    %23 = arith.addf %17, %22 : vector<32x256xf32>
    %24 = vector.extract_strided_slice %0 {offsets = [0, 2], sizes = [32, 1], strides = [1, 1]} : vector<32x3xf32> to vector<32x1xf32>
    %25 = vector.extract_strided_slice %10 {offsets = [2, 0], sizes = [1, 256], strides = [1, 1]} : vector<3x256xf32> to vector<1x256xf32>
    %26 = vector.broadcast %24 : vector<32x1xf32> to vector<32x256xf32>
    %27 = vector.broadcast %25 : vector<1x256xf32> to vector<32x256xf32>
    %28 = arith.mulf %26, %27 : vector<32x256xf32>
    %29 = arith.addf %23, %28 : vector<32x256xf32>
    %cst = arith.constant 0.000000e+00 : f32
    %30 = vector.broadcast %cst : f32 to vector<32x256xf32>
    %31 = arith.cmpf ogt, %29, %30 : vector<32x256xf32>
    %cst_21 = arith.constant 0.00999999977 : f32
    %32 = vector.broadcast %cst_21 : f32 to vector<32x256xf32>
    %33 = arith.mulf %32, %29 : vector<32x256xf32>
    %34 = arith.select %31, %29, %33 : vector<32x256xi1>, vector<32x256xf32>
    %cst_22 = arith.constant dense<0.000000e+00> : vector<256xf32>
    %35 = vector.multi_reduction <add>, %34, %cst_22 [0] : vector<32x256xf32> to vector<256xf32>
    %36 = vector.shape_cast %35 : vector<256xf32> to vector<1x256xf32>
    %cst_23 = arith.constant 3.125000e-02 : f32
    %37 = vector.broadcast %cst_23 : f32 to vector<1x256xf32>
    %38 = arith.mulf %36, %37 : vector<1x256xf32>
    %39 = arith.mulf %34, %34 : vector<32x256xf32>
    %cst_24 = arith.constant dense<0.000000e+00> : vector<256xf32>
    %40 = vector.multi_reduction <add>, %39, %cst_24 [0] : vector<32x256xf32> to vector<256xf32>
    %41 = vector.shape_cast %40 : vector<256xf32> to vector<1x256xf32>
    %cst_25 = arith.constant 3.125000e-02 : f32
    %42 = vector.broadcast %cst_25 : f32 to vector<1x256xf32>
    %43 = arith.mulf %41, %42 : vector<1x256xf32>
    %44 = arith.mulf %38, %38 : vector<1x256xf32>
    %45 = arith.subf %43, %44 : vector<1x256xf32>
    %cst_26 = arith.constant 0.000000e+00 : f32
    %46 = vector.broadcast %cst_26 : f32 to vector<1x256xf32>
    %47 = arith.maximumf %45, %46 : vector<1x256xf32>
    %48 = vector.broadcast %38 : vector<1x256xf32> to vector<32x256xf32>
    %49 = arith.subf %34, %48 : vector<32x256xf32>
    %cst_27 = arith.constant 9.99999974E-6 : f32
    %50 = vector.broadcast %cst_27 : f32 to vector<1x256xf32>
    %51 = arith.addf %47, %50 : vector<1x256xf32>
    %52 = math.rsqrt %51 : vector<1x256xf32>
    %53 = vector.broadcast %52 : vector<1x256xf32> to vector<32x256xf32>
    %54 = arith.mulf %49, %53 : vector<32x256xf32>
    %55 = vector.broadcast %2 : vector<32x1xf32> to vector<32x256xf32>
    %56 = arith.mulf %54, %55 : vector<32x256xf32>
    %57 = vector.broadcast %3 : vector<32x1xf32> to vector<32x256xf32>
    %58 = arith.addf %56, %57 : vector<32x256xf32>
    %cst_28 = arith.constant dense<0.000000e+00> : vector<32x256xf32>
    %59 = tpu.matmul %4, %58, %cst_28 {dimension_numbers = #tpu.dot_dimension_numbers<[1], [0], [0], [1], [0, 0, 1, 1], [], []>} : vector<32x32xf32>, vector<32x256xf32>, vector<32x256xf32> -> vector<32x256xf32>
    %60 = vector.broadcast %5 : vector<32x1xf32> to vector<32x256xf32>
    %61 = arith.addf %59, %60 : vector<32x256xf32>
    %cst_29 = arith.constant 0.000000e+00 : f32
    %62 = vector.broadcast %cst_29 : f32 to vector<32x256xf32>
    %63 = arith.cmpf ogt, %61, %62 : vector<32x256xf32>
    %cst_30 = arith.constant 0.00999999977 : f32
    %64 = vector.broadcast %cst_30 : f32 to vector<32x256xf32>
    %65 = arith.mulf %64, %61 : vector<32x256xf32>
    %66 = arith.select %63, %61, %65 : vector<32x256xi1>, vector<32x256xf32>
    %cst_31 = arith.constant dense<0.000000e+00> : vector<256xf32>
    %67 = vector.multi_reduction <add>, %66, %cst_31 [0] : vector<32x256xf32> to vector<256xf32>
    %68 = vector.shape_cast %67 : vector<256xf32> to vector<1x256xf32>
    %cst_32 = arith.constant 3.125000e-02 : f32
    %69 = vector.broadcast %cst_32 : f32 to vector<1x256xf32>
    %70 = arith.mulf %68, %69 : vector<1x256xf32>
    %71 = arith.mulf %66, %66 : vector<32x256xf32>
    %cst_33 = arith.constant dense<0.000000e+00> : vector<256xf32>
    %72 = vector.multi_reduction <add>, %71, %cst_33 [0] : vector<32x256xf32> to vector<256xf32>
    %73 = vector.shape_cast %72 : vector<256xf32> to vector<1x256xf32>
    %cst_34 = arith.constant 3.125000e-02 : f32
    %74 = vector.broadcast %cst_34 : f32 to vector<1x256xf32>
    %75 = arith.mulf %73, %74 : vector<1x256xf32>
    %76 = arith.mulf %70, %70 : vector<1x256xf32>
    %77 = arith.subf %75, %76 : vector<1x256xf32>
    %cst_35 = arith.constant 0.000000e+00 : f32
    %78 = vector.broadcast %cst_35 : f32 to vector<1x256xf32>
    %79 = arith.maximumf %77, %78 : vector<1x256xf32>
    %80 = vector.broadcast %70 : vector<1x256xf32> to vector<32x256xf32>
    %81 = arith.subf %66, %80 : vector<32x256xf32>
    %cst_36 = arith.constant 9.99999974E-6 : f32
    %82 = vector.broadcast %cst_36 : f32 to vector<1x256xf32>
    %83 = arith.addf %79, %82 : vector<1x256xf32>
    %84 = math.rsqrt %83 : vector<1x256xf32>
    %85 = vector.broadcast %84 : vector<1x256xf32> to vector<32x256xf32>
    %86 = arith.mulf %81, %85 : vector<32x256xf32>
    %87 = vector.broadcast %6 : vector<32x1xf32> to vector<32x256xf32>
    %88 = arith.mulf %86, %87 : vector<32x256xf32>
    %89 = vector.broadcast %7 : vector<32x1xf32> to vector<32x256xf32>
    %90 = arith.addf %88, %89 : vector<32x256xf32>
    %91 = vector.broadcast %8 : vector<32x1xf32> to vector<32x256xf32>
    %92 = arith.mulf %91, %90 : vector<32x256xf32>
    %cst_37 = arith.constant dense<0.000000e+00> : vector<256xf32>
    %93 = vector.multi_reduction <add>, %92, %cst_37 [0] : vector<32x256xf32> to vector<256xf32>
    %94 = vector.shape_cast %93 : vector<256xf32> to vector<1x256xf32>
    %95 = vector.broadcast %9 : vector<1x1xf32> to vector<1x256xf32>
    %96 = arith.addf %94, %95 : vector<1x256xf32>
    %cst_38 = arith.constant 0.000000e+00 : f32
    %97 = vector.broadcast %cst_38 : f32 to vector<1x256xf32>
    %98 = arith.maximumf %96, %97 : vector<1x256xf32>
    %c0_39 = arith.constant 0 : index
    %c0_40 = arith.constant 0 : index
    %99 = vector.load %arg12[%c0_39, %c0_40] : memref<1x256xf32, #tpu.memory_space<vmem>>, vector<1x256xf32>
    tpu.vector_store %arg12[%c0_39, %c0_40], %98 {strides = array<i32>} : memref<1x256xf32, #tpu.memory_space<vmem>>, vector<1x256xf32>,
    return
  }
  func.func @transform_0(%arg0: i32) -> (i32, i32) {
    %c0_i32 = arith.constant 0 : i32
    %c0_i32_0 = arith.constant 0 : i32
    return %c0_i32, %arg0 : i32, i32
  }
  func.func @transform_1(%arg0: i32) -> (i32, i32) {
    %c0_i32 = arith.constant 0 : i32
    %c0_i32_0 = arith.constant 0 : i32
    %c0_i32_1 = arith.constant 0 : i32
    return %c0_i32, %c0_i32_0 : i32, i32
  }
  func.func @transform_2(%arg0: i32) -> (i32, i32) {
    %c0_i32 = arith.constant 0 : i32
    %c0_i32_0 = arith.constant 0 : i32
    %c0_i32_1 = arith.constant 0 : i32
    return %c0_i32, %c0_i32_0 : i32, i32
  }
  func.func @transform_3(%arg0: i32) -> (i32, i32) {
    %c0_i32 = arith.constant 0 : i32
    %c0_i32_0 = arith.constant 0 : i32
    %c0_i32_1 = arith.constant 0 : i32
    return %c0_i32, %c0_i32_0 : i32, i32
  }
  func.func @transform_4(%arg0: i32) -> (i32, i32) {
    %c0_i32 = arith.constant 0 : i32
    %c0_i32_0 = arith.constant 0 : i32
    %c0_i32_1 = arith.constant 0 : i32
    return %c0_i32, %c0_i32_0 : i32, i32
  }
  func.func @transform_5(%arg0: i32) -> (i32, i32) {
    %c0_i32 = arith.constant 0 : i32
    %c0_i32_0 = arith.constant 0 : i32
    %c0_i32_1 = arith.constant 0 : i32
    return %c0_i32, %c0_i32_0 : i32, i32
  }
  func.func @transform_6(%arg0: i32) -> (i32, i32) {
    %c0_i32 = arith.constant 0 : i32
    %c0_i32_0 = arith.constant 0 : i32
    %c0_i32_1 = arith.constant 0 : i32
    return %c0_i32, %c0_i32_0 : i32, i32
  }
  func.func @transform_7(%arg0: i32) -> (i32, i32) {
    %c0_i32 = arith.constant 0 : i32
    %c0_i32_0 = arith.constant 0 : i32
    %c0_i32_1 = arith.constant 0 : i32
    return %c0_i32, %c0_i32_0 : i32, i32
  }
  func.func @transform_8(%arg0: i32) -> (i32, i32) {
    %c0_i32 = arith.constant 0 : i32
    %c0_i32_0 = arith.constant 0 : i32
    %c0_i32_1 = arith.constant 0 : i32
    return %c0_i32, %c0_i32_0 : i32, i32
  }
  func.func @transform_9(%arg0: i32) -> (i32, i32) {
    %c0_i32 = arith.constant 0 : i32
    %c0_i32_0 = arith.constant 0 : i32
    %c0_i32_1 = arith.constant 0 : i32
    return %c0_i32, %c0_i32_0 : i32, i32
  }
  func.func @transform_10(%arg0: i32) -> (i32, i32) {
    %c0_i32 = arith.constant 0 : i32
    %c0_i32_0 = arith.constant 0 : i32
    %c0_i32_1 = arith.constant 0 : i32
    return %c0_i32, %c0_i32_0 : i32, i32
  }
  func.func @transform_11(%arg0: i32) -> (i32, i32) {
    %c0_i32 = arith.constant 0 : i32
    %c0_i32_0 = arith.constant 0 : i32
    return %c0_i32, %arg0 : i32, i32
  }
}

</mosaic_0001>

<llo_original>
// kernel: tpu_custom_call.1
$region0: #{tpu_custom_call.1}
  #allocation0 [shape = 'u32[]', space=smem, size = 0x4, offset = 0x4, fixed_abs, tag = 'smem constant byte address 0x4 - core index']
  #allocation1 [shape = 'u32[144,128]{1,0:T(1,128)}', space=vmem, size = 0x12000, scoped, tag = 'internal scratch']
  #allocation2 [shape = 'f32[1,1]{1,0:T(1,128)S(1)}', space=vmem, size = 0x200, scoped, tag = 'scoped memory for tpu_custom_call.1']
  %s0 = inlined_call_operand.vmem [shape: f32[3,256], index: 0, kind: input, shape index: {}]
  %s1 = inlined_call_operand.vmem [shape: f32[32,3], index: 1, kind: input, shape index: {}]
  %s2 = inlined_call_operand.vmem [shape: f32[32,1], index: 2, kind: input, shape index: {}]
  %s3 = inlined_call_operand.vmem [shape: f32[32,1], index: 3, kind: input, shape index: {}]
  %s4 = inlined_call_operand.vmem [shape: f32[32,1], index: 4, kind: input, shape index: {}]
  %s5 = inlined_call_operand.vmem [shape: f32[32,32], index: 5, kind: input, shape index: {}]
  %s6 = inlined_call_operand.vmem [shape: f32[32,1], index: 6, kind: input, shape index: {}]
  %s7 = inlined_call_operand.vmem [shape: f32[32,1], index: 7, kind: input, shape index: {}]
  %s8 = inlined_call_operand.vmem [shape: f32[32,1], index: 8, kind: input, shape index: {}]
  %s9 = inlined_call_operand.vmem [shape: f32[32,1], index: 9, kind: input, shape index: {}]
  %s10 = inlined_call_operand.<no memory space> [shape: f32[1,1], index: 10, kind: input, shape index: {}]
  %s11 = inlined_call_operand.hbm [shape: f32[1,256], index: 11, kind: output, shape index: {}]
  %s12 = sld [smem:[#allocation0]]
  $region54: #{tpu_custom_call.1} parent=0
    _
  %s14 = ssub.s32 1, %s12
  %s15 = scalar_select 0, %s14, %s12
  %v16 = vstv %s10
  %17 = vst [vmem:[#allocation2] sm:$0x1] %v16
  $region1: #{tpu_custom_call.1} parent=0
    #allocation3 [shape = 'u8[1024]{0}', space=vmem, size = 0x400, scoped, tag = 'output window, operand 0, single buffered']
    #allocation4 [shape = 's32[1]{0}', space=sflag, size = 0x4, scoped, tag = 'scoped memory for tpu_custom_call.1']
    %18 = vsyncpa [#allocation4], 0
    // Predicated region
    $region2: #{tpu_custom_call.1} parent=1 // pred_check
      _
    $region3: #{tpu_custom_call.1} parent=1 // pred_check_branch
      %20 = sbr.rel (0) target = $region5
    $region4: #{tpu_custom_call.1} parent=1 // pred_region
      _
    $region5: #{tpu_custom_call.1} parent=1 // pred_fallthru
      _
    // Predicated region
    $region6: #{tpu_custom_call.1} parent=1 // pred_check
      _
    $region7: #{tpu_custom_call.1} parent=1 // pred_check_branch
      %22 = sbr.rel (0) target = $region9
    $region8: #{tpu_custom_call.1} parent=1 // pred_region
      _
    $region9: #{tpu_custom_call.1} parent=1 // pred_fallthru
      _
    // Predicated region
    $region10: #{tpu_custom_call.1} parent=1 // pred_check
      _
    $region11: #{tpu_custom_call.1} parent=1 // pred_check_branch
      %24 = sbr.rel (0) target = $region13
    $region12: #{tpu_custom_call.1} parent=1 // pred_region
      _
    $region13: #{tpu_custom_call.1} parent=1 // pred_fallthru
      _
    // Predicated region
    $region14: #{tpu_custom_call.1} parent=1 // pred_check
      _
    $region15: #{tpu_custom_call.1} parent=1 // pred_check_branch
      %26 = sbr.rel (0) target = $region17
    $region16: #{tpu_custom_call.1} parent=1 // pred_region
      _
    $region17: #{tpu_custom_call.1} parent=1 // pred_fallthru
      _
    // Predicated region
    $region18: #{tpu_custom_call.1} parent=1 // pred_check
      _
    $region19: #{tpu_custom_call.1} parent=1 // pred_check_branch
      %28 = sbr.rel (0) target = $region21
    $region20: #{tpu_custom_call.1} parent=1 // pred_region
      _
    $region21: #{tpu_custom_call.1} parent=1 // pred_fallthru
      _
    // Predicated region
    $region22: #{tpu_custom_call.1} parent=1 // pred_check
      _
    $region23: #{tpu_custom_call.1} parent=1 // pred_check_branch
      %30 = sbr.rel (0) target = $region25
    $region24: #{tpu_custom_call.1} parent=1 // pred_region
      _
    $region25: #{tpu_custom_call.1} parent=1 // pred_fallthru
      _
    // Predicated region
    $region26: #{tpu_custom_call.1} parent=1 // pred_check
      _
    $region27: #{tpu_custom_call.1} parent=1 // pred_check_branch
      %32 = sbr.rel (0) target = $region29
    $region28: #{tpu_custom_call.1} parent=1 // pred_region
      _
    $region29: #{tpu_custom_call.1} parent=1 // pred_fallthru
      _
    // Predicated region
    $region30: #{tpu_custom_call.1} parent=1 // pred_check
      _
    $region31: #{tpu_custom_call.1} parent=1 // pred_check_branch
      %34 = sbr.rel (0) target = $region33
    $region32: #{tpu_custom_call.1} parent=1 // pred_region
      _
    $region33: #{tpu_custom_call.1} parent=1 // pred_fallthru
      _
    // Predicated region
    $region34: #{tpu_custom_call.1} parent=1 // pred_check
      _
    $region35: #{tpu_custom_call.1} parent=1 // pred_check_branch
      %36 = sbr.rel (0) target = $region37
    $region36: #{tpu_custom_call.1} parent=1 // pred_region
      _
    $region37: #{tpu_custom_call.1} parent=1 // pred_fallthru
      _
    // Predicated region
    $region38: #{tpu_custom_call.1} parent=1 // pred_check
      _
    $region39: #{tpu_custom_call.1} parent=1 // pred_check_branch
      %38 = sbr.rel (0) target = $region41
    $region40: #{tpu_custom_call.1} parent=1 // pred_region
      _
    $region41: #{tpu_custom_call.1} parent=1 // pred_fallthru
      _
    // Predicated region
    $region42: #{tpu_custom_call.1} parent=1 // pred_check
      _
    $region43: #{tpu_custom_call.1} parent=1 // pred_check_branch
      %40 = sbr.rel (0) target = $region45
    $region44: #{tpu_custom_call.1} parent=1 // pred_region
      _
    $region45: #{tpu_custom_call.1} parent=1 // pred_fallthru
      _
    %v41 = vld [vmem:[%s1] sm:$0xff]
    %v42 = vld [vmem:[%s1 + $0x8] sm:$0xff]
    %v43 = vld [vmem:[%s1 + $0x10] sm:$0xff]
    %v44 = vld [vmem:[%s1 + $0x18] sm:$0xff]
    %v45 = vld [vmem:[%s2] sm:$0xff]
    %v46 = vld [vmem:[%s2 + $0x8] sm:$0xff]
    %v47 = vld [vmem:[%s2 + $0x10] sm:$0xff]
    %v48 = vld [vmem:[%s2 + $0x18] sm:$0xff]
    %v49 = vld [vmem:[%s3] sm:$0xff]
    %v50 = vld [vmem:[%s3 + $0x8] sm:$0xff]
    %v51 = vld [vmem:[%s3 + $0x10] sm:$0xff]
    %v52 = vld [vmem:[%s3 + $0x18] sm:$0xff]
    %v53 = vld [vmem:[%s4] sm:$0xff]
    %v54 = vld [vmem:[%s4 + $0x8] sm:$0xff]
    %v55 = vld [vmem:[%s4 + $0x10] sm:$0xff]
    %v56 = vld [vmem:[%s4 + $0x18] sm:$0xff]
    %v57 = vld [vmem:[%s5] sm:$0xff]
    %v58 = vld [vmem:[%s5 + $0x8] sm:$0xff]
    %v59 = vld [vmem:[%s5 + $0x10] sm:$0xff]
    %v60 = vld [vmem:[%s5 + $0x18] sm:$0xff]
    %v61 = vld [vmem:[%s6] sm:$0xff]
    %v62 = vld [vmem:[%s6 + $0x8] sm:$0xff]
    %v63 = vld [vmem:[%s6 + $0x10] sm:$0xff]
    %v64 = vld [vmem:[%s6 + $0x18] sm:$0xff]
    %v65 = vld [vmem:[%s7] sm:$0xff]
    %v66 = vld [vmem:[%s7 + $0x8] sm:$0xff]
    %v67 = vld [vmem:[%s7 + $0x10] sm:$0xff]
    %v68 = vld [vmem:[%s7 + $0x18] sm:$0xff]
    %v69 = vld [vmem:[%s8] sm:$0xff]
    %v70 = vld [vmem:[%s8 + $0x8] sm:$0xff]
    %v71 = vld [vmem:[%s8 + $0x10] sm:$0xff]
    %v72 = vld [vmem:[%s8 + $0x18] sm:$0xff]
    %v73 = vld [vmem:[%s9] sm:$0xff]
    %v74 = vld [vmem:[%s9 + $0x8] sm:$0xff]
    %v75 = vld [vmem:[%s9 + $0x10] sm:$0xff]
    %v76 = vld [vmem:[%s9 + $0x18] sm:$0xff]
    %v77 = vld [vmem:[#allocation2] sm:$0x1]
    %v78 = vld [vmem:[%s0] sm:$0x77]
    %80 = vset.pattern.permute.xlu0 0
    %81 = vperm.xlu0 %80, %v41
    %v82 = vpop.permute.xlu0 %81
    %85 = vset.pattern.permute.xlu0 0
    %86 = vperm.xlu0 %85, %v42
    %v87 = vpop.permute.xlu0 %86
    %90 = vset.pattern.permute.xlu0 0
    %91 = vperm.xlu0 %90, %v43
    %v92 = vpop.permute.xlu0 %91
    %95 = vset.pattern.permute.xlu0 0
    %96 = vperm.xlu0 %95, %v44
    %v97 = vpop.permute.xlu0 %96
    %v100 = vlaneseq
    %v101 = vshrl.u32 %v100, 7
    %v102 = vsub.s32 0, %v101
    %v103 = vrot.slane %v78, %v102
    %v104 = vlaneseq
    %v105 = vshrl.u32 %v104, 7
    %v106 = vsub.s32 4, %v105
    %v107 = vrot.slane %v78, %v106
    %v110 = vlaneseq
    %v111 = vshrl.u32 %v110, 7
    %v112 = vsub.s32 0, %v111
    %v113 = vrot.slane %v103, %v112
    %v114 = vlaneseq
    %v115 = vshrl.u32 %v114, 7
    %v116 = vsub.s32 0, %v115
    %v117 = vrot.slane %v107, %v116
    %v118 = vmul.f32 %v82, %v113
    %v119 = vmul.f32 %v82, %v117
    %v120 = vmul.f32 %v87, %v113
    %v121 = vmul.f32 %v87, %v117
    %v122 = vmul.f32 %v92, %v113
    %v123 = vmul.f32 %v92, %v117
    %v124 = vmul.f32 %v97, %v113
    %v125 = vmul.f32 %v97, %v117
    %127 = vset.pattern.permute.xlu0 0
    %128 = vperm.xlu0 %127, %v45
    %v129 = vpop.permute.xlu0 %128
    %132 = vset.pattern.permute.xlu0 0
    %133 = vperm.xlu0 %132, %v46
    %v134 = vpop.permute.xlu0 %133
    %137 = vset.pattern.permute.xlu0 0
    %138 = vperm.xlu0 %137, %v47
    %v139 = vpop.permute.xlu0 %138
    %142 = vset.pattern.permute.xlu0 0
    %143 = vperm.xlu0 %142, %v48
    %v144 = vpop.permute.xlu0 %143
    %v146 = vadd.f32 %v129, %v118
    %v147 = vadd.f32 %v129, %v119
    %v148 = vadd.f32 %v134, %v120
    %v149 = vadd.f32 %v134, %v121
    %v150 = vadd.f32 %v139, %v122
    %v151 = vadd.f32 %v139, %v123
    %v152 = vadd.f32 %v144, %v124
    %v153 = vadd.f32 %v144, %v125
    %154 = vset.pattern.permute.xlu0 1
    %155 = vperm.xlu0 %154, %v41
    %v156 = vpop.permute.xlu0 %155
    %158 = vset.pattern.permute.xlu0 1
    %159 = vperm.xlu0 %158, %v42
    %v160 = vpop.permute.xlu0 %159
    %162 = vset.pattern.permute.xlu0 1
    %163 = vperm.xlu0 %162, %v43
    %v164 = vpop.permute.xlu0 %163
    %166 = vset.pattern.permute.xlu0 1
    %167 = vperm.xlu0 %166, %v44
    %v168 = vpop.permute.xlu0 %167
    %v170 = vlaneseq
    %v171 = vshrl.u32 %v170, 7
    %v172 = vsub.s32 1, %v171
    %v173 = vrot.slane %v78, %v172
    %v174 = vlaneseq
    %v175 = vshrl.u32 %v174, 7
    %v176 = vsub.s32 5, %v175
    %v177 = vrot.slane %v78, %v176
    %v180 = vlaneseq
    %v181 = vshrl.u32 %v180, 7
    %v182 = vsub.s32 1, %v181
    %v183 = vrot.slane %v173, %v182
    %v184 = vlaneseq
    %v185 = vshrl.u32 %v184, 7
    %v186 = vsub.s32 1, %v185
    %v187 = vrot.slane %v177, %v186
    %v188 = vmul.f32 %v156, %v183
    %v189 = vmul.f32 %v156, %v187
    %v190 = vmul.f32 %v160, %v183
    %v191 = vmul.f32 %v160, %v187
    %v192 = vmul.f32 %v164, %v183
    %v193 = vmul.f32 %v164, %v187
    %v194 = vmul.f32 %v168, %v183
    %v195 = vmul.f32 %v168, %v187
    %v196 = vadd.f32 %v146, %v188
    %v197 = vadd.f32 %v147, %v189
    %v198 = vadd.f32 %v148, %v190
    %v199 = vadd.f32 %v149, %v191
    %v200 = vadd.f32 %v150, %v192
    %v201 = vadd.f32 %v151, %v193
    %v202 = vadd.f32 %v152, %v194
    %v203 = vadd.f32 %v153, %v195
    %204 = vset.pattern.permute.xlu0 2
    %205 = vperm.xlu0 %204, %v41
    %v206 = vpop.permute.xlu0 %205
    %208 = vset.pattern.permute.xlu0 2
    %209 = vperm.xlu0 %208, %v42
    %v210 = vpop.permute.xlu0 %209
    %212 = vset.pattern.permute.xlu0 2
    %213 = vperm.xlu0 %212, %v43
    %v214 = vpop.permute.xlu0 %213
    %216 = vset.pattern.permute.xlu0 2
    %217 = vperm.xlu0 %216, %v44
    %v218 = vpop.permute.xlu0 %217
    %v220 = vlaneseq
    %v221 = vshrl.u32 %v220, 7
    %v222 = vsub.s32 2, %v221
    %v223 = vrot.slane %v78, %v222
    %v224 = vlaneseq
    %v225 = vshrl.u32 %v224, 7
    %v226 = vsub.s32 6, %v225
    %v227 = vrot.slane %v78, %v226
    %v230 = vlaneseq
    %v231 = vshrl.u32 %v230, 7
    %v232 = vsub.s32 2, %v231
    %v233 = vrot.slane %v223, %v232
    %v234 = vlaneseq
    %v235 = vshrl.u32 %v234, 7
    %v236 = vsub.s32 2, %v235
    %v237 = vrot.slane %v227, %v236
    %v238 = vmul.f32 %v206, %v233
    %v239 = vmul.f32 %v206, %v237
    %v240 = vmul.f32 %v210, %v233
    %v241 = vmul.f32 %v210, %v237
    %v242 = vmul.f32 %v214, %v233
    %v243 = vmul.f32 %v214, %v237
    %v244 = vmul.f32 %v218, %v233
    %v245 = vmul.f32 %v218, %v237
    %v246 = vadd.f32 %v196, %v238
    %v247 = vadd.f32 %v197, %v239
    %v248 = vadd.f32 %v198, %v240
    %v249 = vadd.f32 %v199, %v241
    %v250 = vadd.f32 %v200, %v242
    %v251 = vadd.f32 %v201, %v243
    %v252 = vadd.f32 %v202, %v244
    %v253 = vadd.f32 %v203, %v245
    %vm254 = vcmp.gt.f32.partialorder %v246, 0.0
    %vm255 = vcmp.gt.f32.partialorder %v247, 0.0
    %vm256 = vcmp.gt.f32.partialorder %v248, 0.0
    %vm257 = vcmp.gt.f32.partialorder %v249, 0.0
    %vm258 = vcmp.gt.f32.partialorder %v250, 0.0
    %vm259 = vcmp.gt.f32.partialorder %v251, 0.0
    %vm260 = vcmp.gt.f32.partialorder %v252, 0.0
    %vm261 = vcmp.gt.f32.partialorder %v253, 0.0
    %v262 = vmul.f32 %v246, 0.01
    %v263 = vmul.f32 %v247, 0.01
    %v264 = vmul.f32 %v248, 0.01
    %v265 = vmul.f32 %v249, 0.01
    %v266 = vmul.f32 %v250, 0.01
    %v267 = vmul.f32 %v251, 0.01
    %v268 = vmul.f32 %v252, 0.01
    %v269 = vmul.f32 %v253, 0.01
    %v270 = vsel %vm254, %v246, %v262
    %v271 = vsel %vm255, %v247, %v263
    %v272 = vsel %vm256, %v248, %v264
    %v273 = vsel %vm257, %v249, %v265
    %v274 = vsel %vm258, %v250, %v266
    %v275 = vsel %vm259, %v251, %v267
    %v276 = vsel %vm260, %v252, %v268
    %v277 = vsel %vm261, %v253, %v269
    %v278 = vadd.f32 %v270, %v272
    %v279 = vadd.f32 %v278, %v274
    %v280 = vadd.f32 %v279, %v276
    %v281 = vrot.slane %v280, 4
    %v282 = vadd.f32 %v280, %v281
    %v283 = vrot.slane %v282, 2
    %v284 = vadd.f32 %v282, %v283
    %v285 = vrot.slane %v284, 1
    %v286 = vadd.f32 %v284, %v285
    %v287 = vadd.f32 %v271, %v273
    %v288 = vadd.f32 %v287, %v275
    %v289 = vadd.f32 %v288, %v277
    %v290 = vrot.slane %v289, 4
    %v291 = vadd.f32 %v289, %v290
    %v292 = vrot.slane %v291, 2
    %v293 = vadd.f32 %v291, %v292
    %v294 = vrot.slane %v293, 1
    %v295 = vadd.f32 %v293, %v294
    %v296 = vmul.f32 %v286, 0.03125
    %v297 = vmul.f32 %v295, 0.03125
    %v298 = vmul.f32 %v270, %v270
    %v299 = vmul.f32 %v271, %v271
    %v300 = vmul.f32 %v272, %v272
    %v301 = vmul.f32 %v273, %v273
    %v302 = vmul.f32 %v274, %v274
    %v303 = vmul.f32 %v275, %v275
    %v304 = vmul.f32 %v276, %v276
    %v305 = vmul.f32 %v277, %v277
    %v306 = vadd.f32 %v298, %v300
    %v307 = vadd.f32 %v306, %v302
    %v308 = vadd.f32 %v307, %v304
    %v309 = vrot.slane %v308, 4
    %v310 = vadd.f32 %v308, %v309
    %v311 = vrot.slane %v310, 2
    %v312 = vadd.f32 %v310, %v311
    %v313 = vrot.slane %v312, 1
    %v314 = vadd.f32 %v312, %v313
    %v315 = vadd.f32 %v299, %v301
    %v316 = vadd.f32 %v315, %v303
    %v317 = vadd.f32 %v316, %v305
    %v318 = vrot.slane %v317, 4
    %v319 = vadd.f32 %v317, %v318
    %v320 = vrot.slane %v319, 2
    %v321 = vadd.f32 %v319, %v320
    %v322 = vrot.slane %v321, 1
    %v323 = vadd.f32 %v321, %v322
    %v324 = vmul.f32 %v314, 0.03125
    %v325 = vmul.f32 %v323, 0.03125
    %v326 = vmul.f32 %v296, %v296
    %v327 = vmul.f32 %v297, %v297
    %v328 = vsub.f32 %v324, %v326
    %v329 = vsub.f32 %v325, %v327
    %v330 = vmax.f32 %v328, 0.0
    %v331 = vmax.f32 %v329, 0.0
    %v332 = vsub.f32 %v270, %v296
    %v333 = vsub.f32 %v271, %v297
    %v334 = vsub.f32 %v272, %v296
    %v335 = vsub.f32 %v273, %v297
    %v336 = vsub.f32 %v274, %v296
    %v337 = vsub.f32 %v275, %v297
    %v338 = vsub.f32 %v276, %v296
    %v339 = vsub.f32 %v277, %v297
    %v340 = vadd.f32 %v330, 1e-05
    %v341 = vadd.f32 %v331, 1e-05
    %v342 = vrsqrt.pop %v340
    %v343 = vrsqrt.pop %v341
    %v344 = vmul.f32 %v332, %v342
    %v345 = vmul.f32 %v333, %v343
    %v346 = vmul.f32 %v334, %v342
    %v347 = vmul.f32 %v335, %v343
    %v348 = vmul.f32 %v336, %v342
    %v349 = vmul.f32 %v337, %v343
    %v350 = vmul.f32 %v338, %v342
    %v351 = vmul.f32 %v339, %v343
    %353 = vset.pattern.permute.xlu0 0
    %354 = vperm.xlu0 %353, %v49
    %v355 = vpop.permute.xlu0 %354
    %358 = vset.pattern.permute.xlu0 0
    %359 = vperm.xlu0 %358, %v50
    %v360 = vpop.permute.xlu0 %359
    %363 = vset.pattern.permute.xlu0 0
    %364 = vperm.xlu0 %363, %v51
    %v365 = vpop.permute.xlu0 %364
    %368 = vset.pattern.permute.xlu0 0
    %369 = vperm.xlu0 %368, %v52
    %v370 = vpop.permute.xlu0 %369
    %v372 = vmul.f32 %v344, %v355
    %v373 = vmul.f32 %v345, %v355
    %v374 = vmul.f32 %v346, %v360
    %v375 = vmul.f32 %v347, %v360
    %v376 = vmul.f32 %v348, %v365
    %v377 = vmul.f32 %v349, %v365
    %v378 = vmul.f32 %v350, %v370
    %v379 = vmul.f32 %v351, %v370
    %381 = vset.pattern.permute.xlu0 0
    %382 = vperm.xlu0 %381, %v53
    %v383 = vpop.permute.xlu0 %382
    %386 = vset.pattern.permute.xlu0 0
    %387 = vperm.xlu0 %386, %v54
    %v388 = vpop.permute.xlu0 %387
    %391 = vset.pattern.permute.xlu0 0
    %392 = vperm.xlu0 %391, %v55
    %v393 = vpop.permute.xlu0 %392
    %396 = vset.pattern.permute.xlu0 0
    %397 = vperm.xlu0 %396, %v56
    %v398 = vpop.permute.xlu0 %397
    %v400 = vadd.f32 %v372, %v383
    %v401 = vadd.f32 %v373, %v383
    %v402 = vadd.f32 %v374, %v388
    %v403 = vadd.f32 %v375, %v388
    %v404 = vadd.f32 %v376, %v393
    %v405 = vadd.f32 %v377, %v393
    %v406 = vadd.f32 %v378, %v398
    %v407 = vadd.f32 %v379, %v398
    %409 = vset.pattern.permute.xlu0 0
    %410 = vperm.xlu0 %409, %v61
    %v411 = vpop.permute.xlu0 %410
    %414 = vset.pattern.permute.xlu0 0
    %415 = vperm.xlu0 %414, %v62
    %v416 = vpop.permute.xlu0 %415
    %419 = vset.pattern.permute.xlu0 0
    %420 = vperm.xlu0 %419, %v63
    %v421 = vpop.permute.xlu0 %420
    %424 = vset.pattern.permute.xlu0 0
    %425 = vperm.xlu0 %424, %v64
    %v426 = vpop.permute.xlu0 %425
    %vm428 = vcmask 261120
    %v430 = vsel %vm428, %v57, 0
    %v433 = vsel %vm428, %v58, 0
    %v436 = vsel %vm428, %v59, 0
    %v439 = vsel %vm428, %v60, 0
    %441 = vmatprep.subr.mxu0 0.0
    %442 = vmatpush1.msra.mxu0 0.0
    %443 = vmatprep.subr.mxu0 0.0
    %444 = vmatpush1.msra.mxu0 0.0
    %445 = vmatprep.subr.mxu0 0.0
    %446 = vmatpush1.msra.mxu0 0.0
    %447 = vmatprep.subr.mxu0 0.0
    %448 = vmatpush1.msra.mxu0 0.0
    %449 = vmatprep.subr.mxu0 0.0
    %450 = vmatpush1.msra.mxu0 0.0
    %451 = vmatprep.subr.mxu0 0.0
    %452 = vmatpush1.msra.mxu0 0.0
    %453 = vmatprep.subr.mxu0 0.0
    %454 = vmatpush1.msra.mxu0 0.0
    %455 = vmatprep.subr.mxu0 0.0
    %456 = vmatpush1.msra.mxu0 0.0
    %457 = vmatprep.subr.mxu0 0.0
    %458 = vmatpush1.msra.mxu0 0.0
    %459 = vmatprep.subr.mxu0 0.0
    %460 = vmatpush1.msra.mxu0 0.0
    %461 = vmatprep.subr.mxu0 0.0
    %462 = vmatpush1.msra.mxu0 0.0
    %463 = vmatprep.subr.mxu0 0.0
    %464 = vmatpush1.msra.mxu0 0.0
    %465 = vmatprep.subr.mxu0 %v407
    %466 = vmatpush1.msra.mxu0 %v406
    %467 = vmatprep.subr.mxu0 %v405
    %468 = vmatpush1.msra.mxu0 %v404
    %469 = vmatprep.subr.mxu0 %v403
    %470 = vmatpush1.msra.mxu0 %v402
    %471 = vmatprep.subr.mxu0 %v401
    %472 = vmatpush1.msra.mxu0 %v400
    %473 = vmatprep.subr.mxu0 0.0
    %474 = vmatpush2.msra.mxu0 0.0
    %475 = vmatprep.subr.mxu0 0.0
    %476 = vmatpush2.msra.mxu0 0.0
    %477 = vmatprep.subr.mxu0 0.0
    %478 = vmatpush2.msra.mxu0 0.0
    %479 = vmatprep.subr.mxu0 0.0
    %480 = vmatpush2.msra.mxu0 0.0
    %481 = vmatprep.subr.mxu0 0.0
    %482 = vmatpush2.msra.mxu0 0.0
    %483 = vmatprep.subr.mxu0 0.0
    %484 = vmatpush2.msra.mxu0 0.0
    %485 = vmatprep.subr.mxu0 0.0
    %486 = vmatpush2.msra.mxu0 0.0
    %487 = vmatprep.subr.mxu0 0.0
    %488 = vmatpush2.msra.mxu0 0.0
    %489 = vmatprep.subr.mxu0 0.0
    %490 = vmatpush2.msra.mxu0 0.0
    %491 = vmatprep.subr.mxu0 0.0
    %492 = vmatpush2.msra.mxu0 0.0
    %493 = vmatprep.subr.mxu0 0.0
    %494 = vmatpush2.msra.mxu0 0.0
    %495 = vmatprep.subr.mxu0 0.0
    %496 = vmatpush2.msra.mxu0 0.0
    %497 = vmatprep.subr.mxu0 0.0
    %498 = vmatpush2.msra.mxu0 0.0
    %499 = vmatprep.subr.mxu0 0.0
    %500 = vmatpush2.msra.mxu0 0.0
    %501 = vmatprep.subr.mxu0 0.0
    %502 = vmatpush2.msra.mxu0 0.0
    %503 = vmatprep.subr.mxu0 0.0
    %504 = vmatpush2.msra.mxu0 0.0
    %505 = vmatprep.mubr.f32.mxu0 0.0
    %506 = vmatmul.mubr.f32.gmra.mxu0 %v430
    %v507 = vpop.f32.mrf.mxu0
    %v508 = vadd.f32 %v411, %v507
    %v509 = vpop.f32.mrf.mxu0
    %v510 = vadd.f32 %v411, %v509
    %511 = vmatprep.mubr.f32.mxu0 0.0
    %512 = vmatmul.mubr.f32.gmra.mxu0 %v433
    %v513 = vpop.f32.mrf.mxu0
    %v514 = vadd.f32 %v416, %v513
    %v515 = vpop.f32.mrf.mxu0
    %v516 = vadd.f32 %v416, %v515
    %517 = vmatprep.mubr.f32.mxu0 0.0
    %518 = vmatmul.mubr.f32.gmra.mxu0 %v436
    %v519 = vpop.f32.mrf.mxu0
    %v520 = vadd.f32 %v421, %v519
    %v521 = vpop.f32.mrf.mxu0
    %v522 = vadd.f32 %v421, %v521
    %523 = vmatprep.mubr.f32.mxu0 0.0
    %524 = vmatmul.mubr.f32.gmra.mxu0 %v439
    %v525 = vpop.f32.mrf.mxu0
    %v526 = vadd.f32 %v426, %v525
    %v527 = vpop.f32.mrf.mxu0
    %v528 = vadd.f32 %v426, %v527
    %529 = vdwg.mxu0
    %vm530 = vcmp.gt.f32.partialorder %v508, 0.0
    %vm531 = vcmp.gt.f32.partialorder %v510, 0.0
    %vm532 = vcmp.gt.f32.partialorder %v514, 0.0
    %vm533 = vcmp.gt.f32.partialorder %v516, 0.0
    %vm534 = vcmp.gt.f32.partialorder %v520, 0.0
    %vm535 = vcmp.gt.f32.partialorder %v522, 0.0
    %vm536 = vcmp.gt.f32.partialorder %v526, 0.0
    %vm537 = vcmp.gt.f32.partialorder %v528, 0.0
    %v538 = vmul.f32 %v508, 0.01
    %v539 = vmul.f32 %v510, 0.01
    %v540 = vmul.f32 %v514, 0.01
    %v541 = vmul.f32 %v516, 0.01
    %v542 = vmul.f32 %v520, 0.01
    %v543 = vmul.f32 %v522, 0.01
    %v544 = vmul.f32 %v526, 0.01
    %v545 = vmul.f32 %v528, 0.01
    %v546 = vsel %vm530, %v508, %v538
    %v547 = vsel %vm531, %v510, %v539
    %v548 = vsel %vm532, %v514, %v540
    %v549 = vsel %vm533, %v516, %v541
    %v550 = vsel %vm534, %v520, %v542
    %v551 = vsel %vm535, %v522, %v543
    %v552 = vsel %vm536, %v526, %v544
    %v553 = vsel %vm537, %v528, %v545
    %v554 = vadd.f32 %v546, %v548
    %v555 = vadd.f32 %v554, %v550
    %v556 = vadd.f32 %v555, %v552
    %v557 = vrot.slane %v556, 4
    %v558 = vadd.f32 %v556, %v557
    %v559 = vrot.slane %v558, 2
    %v560 = vadd.f32 %v558, %v559
    %v561 = vrot.slane %v560, 1
    %v562 = vadd.f32 %v560, %v561
    %v563 = vadd.f32 %v547, %v549
    %v564 = vadd.f32 %v563, %v551
    %v565 = vadd.f32 %v564, %v553
    %v566 = vrot.slane %v565, 4
    %v567 = vadd.f32 %v565, %v566
    %v568 = vrot.slane %v567, 2
    %v569 = vadd.f32 %v567, %v568
    %v570 = vrot.slane %v569, 1
    %v571 = vadd.f32 %v569, %v570
    %v572 = vmul.f32 %v562, 0.03125
    %v573 = vmul.f32 %v571, 0.03125
    %v574 = vmul.f32 %v546, %v546
    %v575 = vmul.f32 %v547, %v547
    %v576 = vmul.f32 %v548, %v548
    %v577 = vmul.f32 %v549, %v549
    %v578 = vmul.f32 %v550, %v550
    %v579 = vmul.f32 %v551, %v551
    %v580 = vmul.f32 %v552, %v552
    %v581 = vmul.f32 %v553, %v553
    %v582 = vadd.f32 %v574, %v576
    %v583 = vadd.f32 %v582, %v578
    %v584 = vadd.f32 %v583, %v580
    %v585 = vrot.slane %v584, 4
    %v586 = vadd.f32 %v584, %v585
    %v587 = vrot.slane %v586, 2
    %v588 = vadd.f32 %v586, %v587
    %v589 = vrot.slane %v588, 1
    %v590 = vadd.f32 %v588, %v589
    %v591 = vadd.f32 %v575, %v577
    %v592 = vadd.f32 %v591, %v579
    %v593 = vadd.f32 %v592, %v581
    %v594 = vrot.slane %v593, 4
    %v595 = vadd.f32 %v593, %v594
    %v596 = vrot.slane %v595, 2
    %v597 = vadd.f32 %v595, %v596
    %v598 = vrot.slane %v597, 1
    %v599 = vadd.f32 %v597, %v598
    %v600 = vmul.f32 %v590, 0.03125
    %v601 = vmul.f32 %v599, 0.03125
    %v602 = vmul.f32 %v572, %v572
    %v603 = vmul.f32 %v573, %v573
    %v604 = vsub.f32 %v600, %v602
    %v605 = vsub.f32 %v601, %v603
    %v606 = vmax.f32 %v604, 0.0
    %v607 = vmax.f32 %v605, 0.0
    %v608 = vsub.f32 %v546, %v572
    %v609 = vsub.f32 %v547, %v573
    %v610 = vsub.f32 %v548, %v572
    %v611 = vsub.f32 %v549, %v573
    %v612 = vsub.f32 %v550, %v572
    %v613 = vsub.f32 %v551, %v573
    %v614 = vsub.f32 %v552, %v572
    %v615 = vsub.f32 %v553, %v573
    %v616 = vadd.f32 %v606, 1e-05
    %v617 = vadd.f32 %v607, 1e-05
    %v618 = vrsqrt.pop %v616
    %v619 = vrsqrt.pop %v617
    %v620 = vmul.f32 %v608, %v618
    %v621 = vmul.f32 %v609, %v619
    %v622 = vmul.f32 %v610, %v618
    %v623 = vmul.f32 %v611, %v619
    %v624 = vmul.f32 %v612, %v618
    %v625 = vmul.f32 %v613, %v619
    %v626 = vmul.f32 %v614, %v618
    %v627 = vmul.f32 %v615, %v619
    %629 = vset.pattern.permute.xlu0 0
    %630 = vperm.xlu0 %629, %v65
    %v631 = vpop.permute.xlu0 %630
    %634 = vset.pattern.permute.xlu0 0
    %635 = vperm.xlu0 %634, %v66
    %v636 = vpop.permute.xlu0 %635
    %639 = vset.pattern.permute.xlu0 0
    %640 = vperm.xlu0 %639, %v67
    %v641 = vpop.permute.xlu0 %640
    %644 = vset.pattern.permute.xlu0 0
    %645 = vperm.xlu0 %644, %v68
    %v646 = vpop.permute.xlu0 %645
    %v648 = vmul.f32 %v620, %v631
    %v649 = vmul.f32 %v621, %v631
    %v650 = vmul.f32 %v622, %v636
    %v651 = vmul.f32 %v623, %v636
    %v652 = vmul.f32 %v624, %v641
    %v653 = vmul.f32 %v625, %v641
    %v654 = vmul.f32 %v626, %v646
    %v655 = vmul.f32 %v627, %v646
    %657 = vset.pattern.permute.xlu0 0
    %658 = vperm.xlu0 %657, %v69
    %v659 = vpop.permute.xlu0 %658
    %662 = vset.pattern.permute.xlu0 0
    %663 = vperm.xlu0 %662, %v70
    %v664 = vpop.permute.xlu0 %663
    %667 = vset.pattern.permute.xlu0 0
    %668 = vperm.xlu0 %667, %v71
    %v669 = vpop.permute.xlu0 %668
    %672 = vset.pattern.permute.xlu0 0
    %673 = vperm.xlu0 %672, %v72
    %v674 = vpop.permute.xlu0 %673
    %v676 = vadd.f32 %v648, %v659
    %v677 = vadd.f32 %v649, %v659
    %v678 = vadd.f32 %v650, %v664
    %v679 = vadd.f32 %v651, %v664
    %v680 = vadd.f32 %v652, %v669
    %v681 = vadd.f32 %v653, %v669
    %v682 = vadd.f32 %v654, %v674
    %v683 = vadd.f32 %v655, %v674
    %685 = vset.pattern.permute.xlu0 0
    %686 = vperm.xlu0 %685, %v73
    %v687 = vpop.permute.xlu0 %686
    %690 = vset.pattern.permute.xlu0 0
    %691 = vperm.xlu0 %690, %v74
    %v692 = vpop.permute.xlu0 %691
    %695 = vset.pattern.permute.xlu0 0
    %696 = vperm.xlu0 %695, %v75
    %v697 = vpop.permute.xlu0 %696
    %700 = vset.pattern.permute.xlu0 0
    %701 = vperm.xlu0 %700, %v76
    %v702 = vpop.permute.xlu0 %701
    %v704 = vmul.f32 %v687, %v676
    %v705 = vmul.f32 %v687, %v677
    %v706 = vmul.f32 %v692, %v678
    %v707 = vmul.f32 %v692, %v679
    %v708 = vmul.f32 %v697, %v680
    %v709 = vmul.f32 %v697, %v681
    %v710 = vmul.f32 %v702, %v682
    %v711 = vmul.f32 %v702, %v683
    %v712 = vadd.f32 %v704, %v706
    %v713 = vadd.f32 %v712, %v708
    %v714 = vadd.f32 %v713, %v710
    %v715 = vrot.slane %v714, 4
    %v716 = vadd.f32 %v714, %v715
    %v717 = vrot.slane %v716, 2
    %v718 = vadd.f32 %v716, %v717
    %v719 = vrot.slane %v718, 1
    %v720 = vadd.f32 %v718, %v719
    %v721 = vadd.f32 %v705, %v707
    %v722 = vadd.f32 %v721, %v709
    %v723 = vadd.f32 %v722, %v711
    %v724 = vrot.slane %v723, 4
    %v725 = vadd.f32 %v723, %v724
    %v726 = vrot.slane %v725, 2
    %v727 = vadd.f32 %v725, %v726
    %v728 = vrot.slane %v727, 1
    %v729 = vadd.f32 %v727, %v728
    %731 = vset.pattern.permute.xlu0 0
    %732 = vperm.xlu0 %731, %v77
    %v733 = vpop.permute.xlu0 %732
    %v735 = vlaneseq
    %v736 = vshrl.u32 %v735, 7
    %v737 = vsub.s32 0, %v736
    %v738 = vrot.slane %v733, %v737
    %v739 = vadd.f32 %v720, %v738
    %v740 = vadd.f32 %v729, %v738
    %v741 = vmax.f32 %v739, 0.0
    %v742 = vmax.f32 %v740, 0.0
    %v745 = vcombine.low %v741, %v742
    %v747 = vunpack.c.l.s4 1966171168
    %v748 = vunpack.c.0.s8 %v747
    %v749 = vlaneseq
    %v750 = vshrl.u32 %v749, 7
    %v751 = vsub.s32 %v748, %v750
    %v752 = vrot.slane %v745, %v751
    %v754 = vunpack.c.l.s4 1966171168
    %v755 = vunpack.c.0.s8 %v754
    %v756 = vlaneseq
    %v757 = vshrl.u32 %v756, 7
    %v758 = vsub.s32 %v755, %v757
    %v759 = vrot.slane %v752, %v758
    %v761 = vlaneseq
    %vm762 = vcmp.ge.s32.totalorder %v761, 0
    %vm763 = vcmp.lt.s32.totalorder %v761, 256
    %vm764 = vmand %vm762, %vm763
    %765 = vst.msk [vmem:[#allocation3] sm:$0x3] %vm764, %v759
    // Predicated region
    $region46: #{tpu_custom_call.1} parent=1 // pred_check
      _
    $region47: #{tpu_custom_call.1} parent=1 // pred_check_branch
      %767 = sbr.rel (0) target = $region49
    $region48: #{tpu_custom_call.1} parent=1 // pred_region
      %s769 = ssub.s32 32, 32
      %770 = vsyncadd [#allocation4], %s769
      %s772 = sshll.u32 [#allocation3], 4
      %s773 = int_to_ptr.vmem [resolvable:$true] %s772
      %775 = dma.vmem_to_hbm [thread:$0]  %s773, 32, %s11, [#allocation4]
    $region49: #{tpu_custom_call.1} parent=1 // pred_fallthru
      _
    // Predicated region
    $region50: #{tpu_custom_call.1} parent=1 // pred_check
      _
    $region51: #{tpu_custom_call.1} parent=1 // pred_check_branch
      %777 = sbr.rel (0) target = $region53
    $region52: #{tpu_custom_call.1} parent=1 // pred_region
      %778 = dma.done [#allocation4], 32
    $region53: #{tpu_custom_call.1} parent=1 // pred_fallthru
      _
    %779 = vsyncpa [#allocation4], 1

</llo_original>
